<compile_context>
chip_gen: v5e
topology: v5e:2x2
jax: 0.10.0
libtpu: 0.0.40
codegen_flags: <defaults>
</compile_context>

<pallas_src>
import jax
import jax.numpy as jnp
from jax.experimental import pallas as pl
from jax.experimental.pallas import tpu as pltpu


def _random_mix_kernel(x_ref, sel_ref, mix_ref, o_ref):
    # x_ref:   (rows, E)      x.dtype  flattened (batch*seq) token embeddings
    # sel_ref: (rows, 1)      int8     index into mix-in table, or -1 if not mixed
    # mix_ref: (n_vals, E)    f32      pre-gathered, weight-scaled mix-in rows
    # o_ref:   (rows, E)      x.dtype
    sel = sel_ref[...].astype(jnp.int32)          # (rows, 1)
    mix = mix_ref[...]                            # (n_vals, E), already * weight
    n_vals = mix.shape[0]

    addend = jnp.zeros(o_ref.shape, jnp.float32)
    for v in range(n_vals):                       # static unroll; |values| ~ 4
        # Select-chain: one cmp + one select per candidate; sel == -1 never hits.
        addend = jnp.where(sel == v, mix[v][None, :], addend)

    o_ref[...] = (x_ref[...].astype(jnp.float32) + addend).astype(o_ref.dtype)


def _vmem_capacity_bytes() -> int:
    try:
        return int(pltpu.get_tpu_info().vmem_capacity_bytes)
    except Exception:
        return 64 << 20                           # conservative: v7x per-TC VMEM


def _choose_row_tile(n_rows: int, x_row_bytes: int, sel_row_bytes: int,
                     mix_bytes: int, sublane_mult: int) -> int:
    cap = _vmem_capacity_bytes()
    # Tile budget: ~48 MiB on 128 MiB VMEM parts (v5e/v6e), ~32 MiB on v7x.
    budget = min(48 << 20, cap // 2)
    headroom = 6 << 20                            # compiler internal scratch, etc.
    per_row = 4 * x_row_bytes + 2 * sel_row_bytes  # double-buffered x, out, sel
    avail = max(budget - headroom - 2 * mix_bytes, per_row * sublane_mult)
    max_rows_budget = (avail // per_row) // sublane_mult * sublane_mult
    # ~4 MiB x-blocks already reach ~85% of the HBM roofline; bigger buys little.
    max_rows_block = ((4 << 20) // x_row_bytes) // sublane_mult * sublane_mult
    max_rows = max(sublane_mult, min(max_rows_budget, max_rows_block))

    if n_rows <= max_rows:
        # Whole problem in one grid step (round up to the sublane multiple).
        return -(-n_rows // sublane_mult) * sublane_mult

    # Prefer a divisor of n_rows: no row padding, no wrapper pad/slice copies.
    best, best_even = None, None
    for d in range(sublane_mult, max_rows + 1, sublane_mult):
        if n_rows % d == 0:
            best = d
            if (n_rows // d) % 2 == 0:
                best_even = d
    if best is not None:
        # Prefer an even number of grid steps (keeps both v7x TCs busy) unless
        # that would shrink the tile by more than 2x.
        if best_even is not None and 2 * best_even >= best:
            return best_even
        return best
    return max_rows                               # rare fallback: pad rows


def random_mix(x, mask, tok_idx, mixin_rows, weight: float, *, alias_input: bool = False):
    """x: (B, S, E); mask: (B, S) bool; tok_idx: (B, S) int index into `values`;
    mixin_rows: (|values|, E) = emb_table[values]."""
    B, S, E = x.shape
    V_mix = mixin_rows.shape[0]
    N = B * S
    itemsize = jnp.dtype(x.dtype).itemsize

    # VMEM per-row footprints (lane-padded to 128 lanes inside VMEM).
    lanes_e = -(-E // 128) * 128
    x_row_bytes = lanes_e * itemsize
    sel_dtype = jnp.int8 if V_mix < 127 else jnp.int32
    sel_row_bytes = 128 * jnp.dtype(sel_dtype).itemsize
    mix_bytes = (-(-max(V_mix, 1) // 8) * 8) * lanes_e * 4

    # 32 covers f32(8)/bf16(16) sublane tiling for x/out and int8(32) for sel.
    sublane_mult = 32

    row_tile = _choose_row_tile(N, x_row_bytes, sel_row_bytes, mix_bytes, sublane_mult)
    Np = -(-N // row_tile) * row_tile

    xf = x.reshape(N, E)                                  # metadata-only reshape
    # Fused mask + token-choice sidecar: -1 means "leave this row unchanged".
    sel = jnp.where(mask.reshape(N), tok_idx.reshape(N), -1).astype(sel_dtype)
    sel = sel.reshape(N, 1)
    # Fold weight into the tiny mix-in table (negligible wrapper cost).
    mixw = jnp.asarray(weight, jnp.float32) * mixin_rows.astype(jnp.float32)

    if Np != N:                                           # rare fallback path
        xf = jnp.pad(xf, ((0, Np - N), (0, 0)))
        sel = jnp.pad(sel, ((0, Np - N), (0, 0)), constant_values=-1)

    grid = (Np // row_tile,)

    vmem_limit = row_tile * (4 * x_row_bytes + 2 * sel_row_bytes) + 2 * mix_bytes + (6 << 20)
    vmem_limit = int(max(vmem_limit, 16 << 20))

    out = pl.pallas_call(
        _random_mix_kernel,
        out_shape=jax.ShapeDtypeStruct((Np, E), x.dtype),
        grid_spec=pltpu.PrefetchScalarGridSpec(
            num_scalar_prefetch=0,
            grid=grid,
            in_specs=[
                pl.BlockSpec((row_tile, E), lambda i: (i, 0)),   # x rows (full E)
                pl.BlockSpec((row_tile, 1), lambda i: (i, 0)),   # int8 sel sidecar
                pl.BlockSpec((V_mix, E), lambda i: (0, 0)),      # tiny mix-in table
            ],
            out_specs=pl.BlockSpec((row_tile, E), lambda i: (i, 0)),
        ),
        compiler_params=pltpu.CompilerParams(
            dimension_semantics=("parallel",),
            vmem_limit_bytes=vmem_limit,
        ),
        input_output_aliases=({0: 0} if (alias_input and Np == N) else {}),
    )(xf, sel, mixw)

    if Np != N:
        out = out[:N]
    return out.reshape(B, S, E)


if __name__ == "__main__":
    # Small shapes consistent with a token-embedding forward pass.
    B, S, E, V = 2, 16, 128, 32
    p_train = 0.5
    weight = 0.2
    values = jnp.array([2, 5, 7, 11], dtype=jnp.int32)   # allowed mix-in token ids

    key = jax.random.PRNGKey(0)
    k_x, k_mask, k_tok, k_emb = jax.random.split(key, 4)

    # Deterministic "parameters": the embedding table of self._embed._word_emb.
    emb_table = jax.random.normal(k_emb, (V, E), dtype=jnp.float32) * 0.1

    # Input token embeddings.
    x = jax.random.normal(k_x, (B, S, E), dtype=jnp.float32)

    # Host-side randomness, mirroring np.random.choice in the PyTorch module.
    # TODO(synk): numpy RNG has no in-kernel equivalent; randomness is drawn
    # here with jax.random instead.
    mask = jax.random.bernoulli(k_mask, p_train, (B, S))
    tok_idx = jax.random.randint(k_tok, (B, S), 0, values.shape[0])   # index into values

    # Pre-gathered |values|-row mini embedding table (emb_table[values]).
    mixin_rows = emb_table[values]                                    # (|values|, E)

    out = random_mix(x, mask, tok_idx, mixin_rows, weight)
    out = jax.block_until_ready(out)

    # Pure-JAX reference for the same semantics.
    tokens = values[tok_idx]                                          # (B, S) raw token ids
    ref = x + weight * mask[..., None].astype(jnp.float32) * emb_table[tokens]
    assert jnp.allclose(out, ref, atol=1e-5, rtol=1e-5), "mismatch vs reference"

    print("KERNEL_OK")
</pallas_src>

<mosaic_0001>
module attributes {stable_mosaic.version = 11 : i64} {
  func.func @_random_mix_kernel(%arg0: i32, %arg1: memref<32x128xf32, #tpu.memory_space<vmem>>, %arg2: memref<32x1xi8, #tpu.memory_space<vmem>>, %arg3: memref<4x128xf32, #tpu.memory_space<vmem>>, %arg4: memref<32x128xf32, #tpu.memory_space<vmem>>) attributes {dimension_semantics = [#tpu.dimension_semantics<parallel>], iteration_bounds = array<i64: 1>, scalar_prefetch = 0 : i64, scratch_operands = 0 : i64, tpu.core_type = #tpu.core_type<tc>, window_params = [{transform_indices = @transform_0, window_bounds = array<i64: 32, 128>}, {transform_indices = @transform_1, window_bounds = array<i64: 32, 1>}, {pipeline_mode = #tpu.pipeline_mode<synchronous>, transform_indices = @transform_2, window_bounds = array<i64: 4, 128>}, {transform_indices = @transform_3, window_bounds = array<i64: 32, 128>}]} {
    %c0 = arith.constant 0 : index
    %c0_0 = arith.constant 0 : index
    %0 = vector.load %arg2[%c0, %c0_0] : memref<32x1xi8, #tpu.memory_space<vmem>>, vector<32x1xi8>
    %1 = arith.extsi %0 : vector<32x1xi8> to vector<32x1xi32>
    %c0_1 = arith.constant 0 : index
    %c0_2 = arith.constant 0 : index
    %2 = vector.load %arg3[%c0_1, %c0_2] : memref<4x128xf32, #tpu.memory_space<vmem>>, vector<4x128xf32>
    %cst = arith.constant 0.000000e+00 : f32
    %3 = vector.broadcast %cst : f32 to vector<32x128xf32>
    %c0_i32 = arith.constant 0 : i32
    %4 = vector.broadcast %c0_i32 : i32 to vector<32x1xi32>
    %5 = arith.cmpi eq, %1, %4 : vector<32x1xi32>
    %6 = vector.extract_strided_slice %2 {offsets = [0, 0], sizes = [1, 128], strides = [1, 1]} : vector<4x128xf32> to vector<1x128xf32>
    %7 = vector.shape_cast %6 : vector<1x128xf32> to vector<128xf32>
    %8 = vector.shape_cast %7 : vector<128xf32> to vector<1x128xf32>
    %9 = vector.shape_cast %5 : vector<32x1xi1> to vector<32x1xi1>
    %10 = vector.broadcast %9 : vector<32x1xi1> to vector<32x128xi1>
    %11 = vector.shape_cast %8 : vector<1x128xf32> to vector<1x128xf32>
    %12 = vector.broadcast %11 : vector<1x128xf32> to vector<32x128xf32>
    %13 = arith.select %10, %12, %3 : vector<32x128xi1>, vector<32x128xf32>
    %c1_i32 = arith.constant 1 : i32
    %14 = vector.broadcast %c1_i32 : i32 to vector<32x1xi32>
    %15 = arith.cmpi eq, %1, %14 : vector<32x1xi32>
    %16 = vector.extract_strided_slice %2 {offsets = [1, 0], sizes = [1, 128], strides = [1, 1]} : vector<4x128xf32> to vector<1x128xf32>
    %17 = vector.shape_cast %16 : vector<1x128xf32> to vector<128xf32>
    %18 = vector.shape_cast %17 : vector<128xf32> to vector<1x128xf32>
    %19 = vector.shape_cast %15 : vector<32x1xi1> to vector<32x1xi1>
    %20 = vector.broadcast %19 : vector<32x1xi1> to vector<32x128xi1>
    %21 = vector.shape_cast %18 : vector<1x128xf32> to vector<1x128xf32>
    %22 = vector.broadcast %21 : vector<1x128xf32> to vector<32x128xf32>
    %23 = arith.select %20, %22, %13 : vector<32x128xi1>, vector<32x128xf32>
    %c2_i32 = arith.constant 2 : i32
    %24 = vector.broadcast %c2_i32 : i32 to vector<32x1xi32>
    %25 = arith.cmpi eq, %1, %24 : vector<32x1xi32>
    %26 = vector.extract_strided_slice %2 {offsets = [2, 0], sizes = [1, 128], strides = [1, 1]} : vector<4x128xf32> to vector<1x128xf32>
    %27 = vector.shape_cast %26 : vector<1x128xf32> to vector<128xf32>
    %28 = vector.shape_cast %27 : vector<128xf32> to vector<1x128xf32>
    %29 = vector.shape_cast %25 : vector<32x1xi1> to vector<32x1xi1>
    %30 = vector.broadcast %29 : vector<32x1xi1> to vector<32x128xi1>
    %31 = vector.shape_cast %28 : vector<1x128xf32> to vector<1x128xf32>
    %32 = vector.broadcast %31 : vector<1x128xf32> to vector<32x128xf32>
    %33 = arith.select %30, %32, %23 : vector<32x128xi1>, vector<32x128xf32>
    %c3_i32 = arith.constant 3 : i32
    %34 = vector.broadcast %c3_i32 : i32 to vector<32x1xi32>
    %35 = arith.cmpi eq, %1, %34 : vector<32x1xi32>
    %36 = vector.extract_strided_slice %2 {offsets = [3, 0], sizes = [1, 128], strides = [1, 1]} : vector<4x128xf32> to vector<1x128xf32>
    %37 = vector.shape_cast %36 : vector<1x128xf32> to vector<128xf32>
    %38 = vector.shape_cast %37 : vector<128xf32> to vector<1x128xf32>
    %39 = vector.shape_cast %35 : vector<32x1xi1> to vector<32x1xi1>
    %40 = vector.broadcast %39 : vector<32x1xi1> to vector<32x128xi1>
    %41 = vector.shape_cast %38 : vector<1x128xf32> to vector<1x128xf32>
    %42 = vector.broadcast %41 : vector<1x128xf32> to vector<32x128xf32>
    %43 = arith.select %40, %42, %33 : vector<32x128xi1>, vector<32x128xf32>
    %c0_3 = arith.constant 0 : index
    %c0_4 = arith.constant 0 : index
    %44 = vector.load %arg1[%c0_3, %c0_4] : memref<32x128xf32, #tpu.memory_space<vmem>>, vector<32x128xf32>
    %45 = arith.addf %44, %43 : vector<32x128xf32>
    %c0_5 = arith.constant 0 : index
    %c0_6 = arith.constant 0 : index
    %46 = vector.load %arg4[%c0_5, %c0_6] : memref<32x128xf32, #tpu.memory_space<vmem>>, vector<32x128xf32>
    tpu.vector_store %arg4[%c0_5, %c0_6], %45 {strides = array<i32>} : memref<32x128xf32, #tpu.memory_space<vmem>>, vector<32x128xf32>,
    return
  }
  func.func @transform_0(%arg0: i32) -> (i32, i32) {
    %c0_i32 = arith.constant 0 : i32
    %c0_i32_0 = arith.constant 0 : i32
    return %arg0, %c0_i32 : i32, i32
  }
  func.func @transform_1(%arg0: i32) -> (i32, i32) {
    %c0_i32 = arith.constant 0 : i32
    %c0_i32_0 = arith.constant 0 : i32
    return %arg0, %c0_i32 : i32, i32
  }
  func.func @transform_2(%arg0: i32) -> (i32, i32) {
    %c0_i32 = arith.constant 0 : i32
    %c0_i32_0 = arith.constant 0 : i32
    %c0_i32_1 = arith.constant 0 : i32
    return %c0_i32, %c0_i32_0 : i32, i32
  }
  func.func @transform_3(%arg0: i32) -> (i32, i32) {
    %c0_i32 = arith.constant 0 : i32
    %c0_i32_0 = arith.constant 0 : i32
    return %arg0, %c0_i32 : i32, i32
  }
}

</mosaic_0001>

<llo_original>
// kernel: tpu_custom_call.1
$region0: #{tpu_custom_call.1}
  #allocation0 [shape = 'u32[]', space=smem, size = 0x4, offset = 0x4, fixed_abs, tag = 'smem constant byte address 0x4 - core index']
  #allocation1 [shape = 'u32[72,128]{1,0:T(1,128)}', space=vmem, size = 0x9000, scoped, tag = 'internal scratch']
  %s0 = inlined_call_operand.hbm [shape: f32[32,128], index: 0, kind: input, shape index: {}]
  %s1 = inlined_call_operand.vmem [shape: s8[32,1], index: 1, kind: input, shape index: {}]
  %s2 = inlined_call_operand.vmem [shape: f32[4,128], index: 2, kind: input, shape index: {}]
  %s3 = inlined_call_operand.hbm [shape: f32[32,128], index: 3, kind: output, shape index: {}]
  %s4 = sld [smem:[#allocation0]]
  $region26: #{tpu_custom_call.1} parent=0
    _
  %s6 = ssub.s32 1, %s4
  %s7 = scalar_select 0, %s6, %s4
  $region1: #{tpu_custom_call.1} parent=0
    #allocation2 [shape = 'u8[16384]{0}', space=vmem, size = 0x4000, scoped, tag = 'input window, operand 0, single buffered']
    #allocation3 [shape = 's32[1]{0}', space=sflag, size = 0x4, scoped, tag = 'scoped memory for tpu_custom_call.1']
    #allocation4 [shape = 's32[1]{0}', space=sflag, size = 0x4, scoped, tag = 'scoped memory for tpu_custom_call.1']
    #allocation5 [shape = 'u8[16384]{0}', space=vmem, size = 0x4000, scoped, tag = 'output window, operand 0, single buffered']
    %8 = vsyncpa [#allocation3], 0
    %9 = vsyncpa [#allocation4], 0
    // Predicated region
    $region2: #{tpu_custom_call.1} parent=1 // pred_check
      _
    $region3: #{tpu_custom_call.1} parent=1 // pred_check_branch
      %11 = sbr.rel (0) target = $region5
    $region4: #{tpu_custom_call.1} parent=1 // pred_region
      %13 = vsyncadd [#allocation3], 0
      %s14 = sshll.u32 %s0, 4
      %s15 = int_to_ptr.hbm [resolvable:$true] %s14
      %s16 = sshll.u32 [#allocation2], 4
      %s17 = int_to_ptr.vmem [resolvable:$true] %s16
      %22 = dma.hbm_to_vmem [thread:$0]  %s15, 512, %s17, [#allocation3], 128, 128, 8
    $region5: #{tpu_custom_call.1} parent=1 // pred_fallthru
      _
    // Predicated region
    $region6: #{tpu_custom_call.1} parent=1 // pred_check
      _
    $region7: #{tpu_custom_call.1} parent=1 // pred_check_branch
      %24 = sbr.rel (0) target = $region9
    $region8: #{tpu_custom_call.1} parent=1 // pred_region
      _
    $region9: #{tpu_custom_call.1} parent=1 // pred_fallthru
      _
    // Predicated region
    $region10: #{tpu_custom_call.1} parent=1 // pred_check
      _
    $region11: #{tpu_custom_call.1} parent=1 // pred_check_branch
      %26 = sbr.rel (0) target = $region13
    $region12: #{tpu_custom_call.1} parent=1 // pred_region
      _
    $region13: #{tpu_custom_call.1} parent=1 // pred_fallthru
      _
    // Predicated region
    $region14: #{tpu_custom_call.1} parent=1 // pred_check
      _
    $region15: #{tpu_custom_call.1} parent=1 // pred_check_branch
      %28 = sbr.rel (0) target = $region17
    $region16: #{tpu_custom_call.1} parent=1 // pred_region
      %30 = dma.done [#allocation3], 512
    $region17: #{tpu_custom_call.1} parent=1 // pred_fallthru
      _
    %v31 = vld [vmem:[%s1] sm:$0x3]
    %v32 = vld [vmem:[%s1 + $0x2] sm:$0x3]
    %v33 = vld [vmem:[%s1 + $0x4] sm:$0x3]
    %v34 = vld [vmem:[%s1 + $0x6] sm:$0x3]
    %v35 = vunpack.c.0.s8 %v31
    %v36 = vunpack.c.0.s8 %v32
    %v37 = vunpack.c.0.s8 %v33
    %v38 = vunpack.c.0.s8 %v34
    %v39 = vld [vmem:[%s2] sm:$0xf]
    %vm40 = vcmp.eq.s32.totalorder %v35, 0
    %vm41 = vcmp.eq.s32.totalorder %v36, 0
    %vm42 = vcmp.eq.s32.totalorder %v37, 0
    %vm43 = vcmp.eq.s32.totalorder %v38, 0
    %v44 = vsel %vm40, 1, 0
    %v45 = vsel %vm41, 1, 0
    %v46 = vsel %vm42, 1, 0
    %v47 = vsel %vm43, 1, 0
    %48 = vset.pattern.permute.xlu0 0
    %49 = vperm.xlu0 %48, %v44
    %v50 = vpop.permute.xlu0 %49
    %51 = vset.pattern.permute.xlu0 0
    %52 = vperm.xlu0 %51, %v45
    %v53 = vpop.permute.xlu0 %52
    %54 = vset.pattern.permute.xlu0 0
    %55 = vperm.xlu0 %54, %v46
    %v56 = vpop.permute.xlu0 %55
    %57 = vset.pattern.permute.xlu0 0
    %58 = vperm.xlu0 %57, %v47
    %v59 = vpop.permute.xlu0 %58
    %vm60 = vcmp.eq.s32.totalorder %v50, 1
    %vm61 = vcmp.eq.s32.totalorder %v53, 1
    %vm62 = vcmp.eq.s32.totalorder %v56, 1
    %vm63 = vcmp.eq.s32.totalorder %v59, 1
    %v64 = vperm.slane %v39, 0
    %v65 = vsel %vm60, %v64, 0.0
    %v66 = vsel %vm61, %v64, 0.0
    %v67 = vsel %vm62, %v64, 0.0
    %v68 = vsel %vm63, %v64, 0.0
    %vm69 = vcmp.eq.s32.totalorder %v35, 1
    %vm70 = vcmp.eq.s32.totalorder %v36, 1
    %vm71 = vcmp.eq.s32.totalorder %v37, 1
    %vm72 = vcmp.eq.s32.totalorder %v38, 1
    %v73 = vsel %vm69, 1, 0
    %v74 = vsel %vm70, 1, 0
    %v75 = vsel %vm71, 1, 0
    %v76 = vsel %vm72, 1, 0
    %77 = vset.pattern.permute.xlu0 0
    %78 = vperm.xlu0 %77, %v73
    %v79 = vpop.permute.xlu0 %78
    %80 = vset.pattern.permute.xlu0 0
    %81 = vperm.xlu0 %80, %v74
    %v82 = vpop.permute.xlu0 %81
    %83 = vset.pattern.permute.xlu0 0
    %84 = vperm.xlu0 %83, %v75
    %v85 = vpop.permute.xlu0 %84
    %86 = vset.pattern.permute.xlu0 0
    %87 = vperm.xlu0 %86, %v76
    %v88 = vpop.permute.xlu0 %87
    %vm89 = vcmp.eq.s32.totalorder %v79, 1
    %vm90 = vcmp.eq.s32.totalorder %v82, 1
    %vm91 = vcmp.eq.s32.totalorder %v85, 1
    %vm92 = vcmp.eq.s32.totalorder %v88, 1
    %v93 = vperm.slane %v39, 1
    %v94 = vsel %vm89, %v93, %v65
    %v95 = vsel %vm90, %v93, %v66
    %v96 = vsel %vm91, %v93, %v67
    %v97 = vsel %vm92, %v93, %v68
    %vm98 = vcmp.eq.s32.totalorder %v35, 2
    %vm99 = vcmp.eq.s32.totalorder %v36, 2
    %vm100 = vcmp.eq.s32.totalorder %v37, 2
    %vm101 = vcmp.eq.s32.totalorder %v38, 2
    %v102 = vsel %vm98, 1, 0
    %v103 = vsel %vm99, 1, 0
    %v104 = vsel %vm100, 1, 0
    %v105 = vsel %vm101, 1, 0
    %106 = vset.pattern.permute.xlu0 0
    %107 = vperm.xlu0 %106, %v102
    %v108 = vpop.permute.xlu0 %107
    %109 = vset.pattern.permute.xlu0 0
    %110 = vperm.xlu0 %109, %v103
    %v111 = vpop.permute.xlu0 %110
    %112 = vset.pattern.permute.xlu0 0
    %113 = vperm.xlu0 %112, %v104
    %v114 = vpop.permute.xlu0 %113
    %115 = vset.pattern.permute.xlu0 0
    %116 = vperm.xlu0 %115, %v105
    %v117 = vpop.permute.xlu0 %116
    %vm118 = vcmp.eq.s32.totalorder %v108, 1
    %vm119 = vcmp.eq.s32.totalorder %v111, 1
    %vm120 = vcmp.eq.s32.totalorder %v114, 1
    %vm121 = vcmp.eq.s32.totalorder %v117, 1
    %v122 = vperm.slane %v39, 2
    %v123 = vsel %vm118, %v122, %v94
    %v124 = vsel %vm119, %v122, %v95
    %v125 = vsel %vm120, %v122, %v96
    %v126 = vsel %vm121, %v122, %v97
    %vm127 = vcmp.eq.s32.totalorder %v35, 3
    %vm128 = vcmp.eq.s32.totalorder %v36, 3
    %vm129 = vcmp.eq.s32.totalorder %v37, 3
    %vm130 = vcmp.eq.s32.totalorder %v38, 3
    %v131 = vsel %vm127, 1, 0
    %v132 = vsel %vm128, 1, 0
    %v133 = vsel %vm129, 1, 0
    %v134 = vsel %vm130, 1, 0
    %135 = vset.pattern.permute.xlu0 0
    %136 = vperm.xlu0 %135, %v131
    %v137 = vpop.permute.xlu0 %136
    %138 = vset.pattern.permute.xlu0 0
    %139 = vperm.xlu0 %138, %v132
    %v140 = vpop.permute.xlu0 %139
    %141 = vset.pattern.permute.xlu0 0
    %142 = vperm.xlu0 %141, %v133
    %v143 = vpop.permute.xlu0 %142
    %144 = vset.pattern.permute.xlu0 0
    %145 = vperm.xlu0 %144, %v134
    %v146 = vpop.permute.xlu0 %145
    %vm147 = vcmp.eq.s32.totalorder %v137, 1
    %vm148 = vcmp.eq.s32.totalorder %v140, 1
    %vm149 = vcmp.eq.s32.totalorder %v143, 1
    %vm150 = vcmp.eq.s32.totalorder %v146, 1
    %v151 = vperm.slane %v39, 3
    %v152 = vsel %vm147, %v151, %v123
    %v153 = vsel %vm148, %v151, %v124
    %v154 = vsel %vm149, %v151, %v125
    %v155 = vsel %vm150, %v151, %v126
    %v156 = vld [vmem:[#allocation2] sm:$0xff]
    %v157 = vld [vmem:[#allocation2 + $0x8] sm:$0xff]
    %v158 = vld [vmem:[#allocation2 + $0x10] sm:$0xff]
    %v159 = vld [vmem:[#allocation2 + $0x18] sm:$0xff]
    %v160 = vadd.f32 %v156, %v152
    %v161 = vadd.f32 %v157, %v153
    %v162 = vadd.f32 %v158, %v154
    %v163 = vadd.f32 %v159, %v155
    %164 = vst [vmem:[#allocation5] sm:$0xff] %v160
    %165 = vst [vmem:[#allocation5 + $0x8] sm:$0xff] %v161
    %166 = vst [vmem:[#allocation5 + $0x10] sm:$0xff] %v162
    %167 = vst [vmem:[#allocation5 + $0x18] sm:$0xff] %v163
    // Predicated region
    $region18: #{tpu_custom_call.1} parent=1 // pred_check
      _
    $region19: #{tpu_custom_call.1} parent=1 // pred_check_branch
      %169 = sbr.rel (0) target = $region21
    $region20: #{tpu_custom_call.1} parent=1 // pred_region
      %171 = vsyncadd [#allocation4], 0
      %s172 = sshll.u32 [#allocation5], 4
      %s173 = int_to_ptr.vmem [resolvable:$true] %s172
      %s174 = sshll.u32 %s3, 4
      %s175 = int_to_ptr.hbm [resolvable:$true] %s174
      %180 = dma.vmem_to_hbm [thread:$0]  %s173, 512, %s175, [#allocation4], 128, 128, 8
    $region21: #{tpu_custom_call.1} parent=1 // pred_fallthru
      _
    // Predicated region
    $region22: #{tpu_custom_call.1} parent=1 // pred_check
      _
    $region23: #{tpu_custom_call.1} parent=1 // pred_check_branch
      %182 = sbr.rel (0) target = $region25
    $region24: #{tpu_custom_call.1} parent=1 // pred_region
      %184 = dma.done [#allocation4], 512
    $region25: #{tpu_custom_call.1} parent=1 // pred_fallthru
      _
    %185 = vsyncpa [#allocation3], 1
    %186 = vsyncpa [#allocation4], 1

</llo_original>
